<compile_context>
chip_gen: v6e
topology: v6e:2x2x1
jax: 0.10.0
libtpu: 0.0.40
codegen_flags: <defaults>
</compile_context>

<pallas_src>
import jax
import jax.numpy as jnp
from jax.experimental import pallas as pl
from jax.experimental.pallas import tpu as pltpu


def _round_up(x, m):
    return ((x + m - 1) // m) * m


def _tok_pos_kernel(ids_sp, pos_sp, txt_hbm, pos_hbm, out_ref,
                    tok_buf, pos_buf, sem):
    """One row tile: DMA-gather TM token rows + TM positional rows, add, store."""
    tm = out_ref.shape[0]
    base = pl.program_id(0) * tm

    # Fire all row gathers for this tile (token + positional tables).
    @pl.loop(0, tm)
    def _(r):
        tok = ids_sp[base + r]
        pos = pos_sp[base + r]
        pltpu.make_async_copy(txt_hbm.at[tok], tok_buf.at[r], sem.at[0]).start()
        pltpu.make_async_copy(pos_hbm.at[pos], pos_buf.at[r], sem.at[1]).start()

    # Wait for all of them (every copy on a given semaphore has the same size).
    @pl.loop(0, tm)
    def _(r):
        pltpu.make_async_copy(txt_hbm.at[0], tok_buf.at[0], sem.at[0]).wait()
        pltpu.make_async_copy(pos_hbm.at[0], pos_buf.at[0], sem.at[1]).wait()

    out_ref[...] = (tok_buf[...] + pos_buf[...]).astype(out_ref.dtype)


def _tok_only_kernel(ids_sp, txt_hbm, out_ref, tok_buf, sem):
    """abs_pos_emb=False path: token embedding gather only."""
    tm = out_ref.shape[0]
    base = pl.program_id(0) * tm

    @pl.loop(0, tm)
    def _(r):
        tok = ids_sp[base + r]
        pltpu.make_async_copy(txt_hbm.at[tok], tok_buf.at[r], sem.at[0]).start()

    @pl.loop(0, tm)
    def _(r):
        pltpu.make_async_copy(txt_hbm.at[0], tok_buf.at[0], sem.at[0]).wait()

    out_ref[...] = tok_buf[...].astype(out_ref.dtype)


def token_input_adapter(x, txt_table, pos_table=None, abs_pos=None,
                        abs_pos_emb=True, tile_rows=512):
    """x: (B, S) int token ids.  Returns (B, S, C) in txt_table.dtype."""
    B, S = x.shape
    V, C = txt_table.shape
    N = B * S
    dtype = txt_table.dtype
    itemsize = jnp.dtype(dtype).itemsize

    # Lane-dense channel axis and row tiling (multiple of 8 sublanes).
    Cp = _round_up(C, 128)
    TM = min(int(tile_rows), _round_up(N, 8))
    Np = _round_up(N, TM)
    grid = Np // TM

    # Clamp (PyTorch would raise on OOB ids; we clamp so the DMA stays in bounds)
    # and pad the flattened id stream to a whole number of tiles.
    ids = jnp.clip(x.reshape(N).astype(jnp.int32), 0, V - 1)
    if Np != N:
        ids = jnp.pad(ids, (0, Np - N))

    txt_p = txt_table if Cp == C else jnp.pad(txt_table, ((0, 0), (0, Cp - C)))

    # VMEM budget: gather scratch (+ pos scratch) + double-buffered out block.
    vmem_bytes = 4 * TM * Cp * itemsize + (4 << 20)
    vmem_bytes = int(min(max(vmem_bytes, 8 << 20), 48 << 20))
    cparams = pltpu.CompilerParams(
        dimension_semantics=("parallel",),   # shard row tiles across TCs (v7x)
        vmem_limit_bytes=vmem_bytes,
    )

    if abs_pos_emb:
        if pos_table is None:
            raise ValueError("pos_table required when abs_pos_emb=True")
        L = pos_table.shape[0]
        if abs_pos is None:
            abs_pos = jnp.broadcast_to(jnp.arange(S, dtype=jnp.int32), (B, S))
        elif S < abs_pos.shape[1]:
            abs_pos = abs_pos[:, -S:]
        pos_ids = jnp.clip(abs_pos.reshape(N).astype(jnp.int32), 0, L - 1)
        if Np != N:
            pos_ids = jnp.pad(pos_ids, (0, Np - N))
        pos_p = pos_table if Cp == C else jnp.pad(pos_table, ((0, 0), (0, Cp - C)))

        grid_spec = pltpu.PrefetchScalarGridSpec(
            num_scalar_prefetch=2,                     # ids, pos -> SMEM
            grid=(grid,),
            in_specs=[
                pl.BlockSpec(memory_space=pl.ANY),     # txt table stays in HBM
                pl.BlockSpec(memory_space=pl.ANY),     # pos table stays in HBM
            ],
            out_specs=pl.BlockSpec((TM, Cp), lambda i, *_: (i, 0)),
            scratch_shapes=[
                pltpu.VMEM((TM, Cp), dtype),           # token gather buffer
                pltpu.VMEM((TM, Cp), dtype),           # positional gather buffer
                pltpu.SemaphoreType.DMA((2,)),
            ],
        )
        out_flat = pl.pallas_call(
            _tok_pos_kernel,
            out_shape=jax.ShapeDtypeStruct((Np, Cp), dtype),
            grid_spec=grid_spec,
            compiler_params=cparams,
        )(ids, pos_ids, txt_p, pos_p)
    else:
        grid_spec = pltpu.PrefetchScalarGridSpec(
            num_scalar_prefetch=1,                     # ids -> SMEM
            grid=(grid,),
            in_specs=[pl.BlockSpec(memory_space=pl.ANY)],
            out_specs=pl.BlockSpec((TM, Cp), lambda i, *_: (i, 0)),
            scratch_shapes=[
                pltpu.VMEM((TM, Cp), dtype),
                pltpu.SemaphoreType.DMA((1,)),
            ],
        )
        out_flat = pl.pallas_call(
            _tok_only_kernel,
            out_shape=jax.ShapeDtypeStruct((Np, Cp), dtype),
            grid_spec=grid_spec,
            compiler_params=cparams,
        )(ids, txt_p)

    return out_flat[:N, :C].reshape(B, S, C)


if __name__ == "__main__":
    # Small deterministic setup consistent with the module's __init__.
    vocab_size = 32
    max_seq_len = 16
    num_input_channels = 32   # C
    B, S = 2, 8

    key = jax.random.PRNGKey(0)
    k_tok, k_txt, k_pos = jax.random.split(key, 3)

    # nn.Embedding default init ~ N(0, 1)
    txt_table = jax.random.normal(k_txt, (vocab_size, num_input_channels), jnp.float32)
    pos_table = jax.random.normal(k_pos, (max_seq_len, num_input_channels), jnp.float32)

    x = jax.random.randint(k_tok, (B, S), 0, vocab_size, dtype=jnp.int32)

    # abs_pos_emb=True path (default positions 0..S-1 broadcast over batch).
    out = token_input_adapter(x, txt_table, pos_table, abs_pos=None, abs_pos_emb=True)
    out = jax.block_until_ready(out)

    pos_idx = jnp.broadcast_to(jnp.arange(S, dtype=jnp.int32), (B, S))
    ref = txt_table[x] + pos_table[pos_idx]
    assert out.shape == (B, S, num_input_channels)
    assert jnp.allclose(out, ref, atol=1e-5, rtol=1e-5), "mismatch vs reference (pos path)"

    # abs_pos_emb=False path (token embedding only, no positional work at all).
    out2 = token_input_adapter(x, txt_table, abs_pos_emb=False)
    out2 = jax.block_until_ready(out2)
    assert jnp.allclose(out2, txt_table[x], atol=1e-5, rtol=1e-5), "mismatch vs reference (txt-only)"

    print("KERNEL_OK")
</pallas_src>

<mosaic_0001>
module attributes {stable_mosaic.version = 11 : i64} {
  func.func @_tok_pos_kernel(%arg0: i32, %arg1: memref<16xi32, #tpu.memory_space<smem>>, %arg2: memref<16xi32, #tpu.memory_space<smem>>, %arg3: memref<32x128xf32, #tpu.memory_space<any>>, %arg4: memref<16x128xf32, #tpu.memory_space<any>>, %arg5: memref<16x128xf32, #tpu.memory_space<vmem>>, %arg6: memref<16x128xf32, #tpu.memory_space<vmem>>, %arg7: memref<16x128xf32, #tpu.memory_space<vmem>>, %arg8: memref<2x!tpu.dma_semaphore, #tpu.memory_space<semaphore_mem>>) attributes {dimension_semantics = [#tpu.dimension_semantics<parallel>], iteration_bounds = array<i64: 1>, scalar_prefetch = 2 : i64, scratch_operands = 3 : i64, tpu.core_type = #tpu.core_type<tc>, window_params = [{}, {}, {transform_indices = @transform_2, window_bounds = array<i64: 16, 128>}]} {
    %c16_i32 = arith.constant 16 : i32
    %0 = arith.muli %arg0, %c16_i32 : i32
    %c0_i32 = arith.constant 0 : i32
    %c16_i32_0 = arith.constant 16 : i32
    %1 = arith.addi %c0_i32, %c16_i32_0 : i32
    %c1_i32 = arith.constant 1 : i32
    scf.for %arg9 = %c0_i32 to %1 step %c1_i32  : i32 {
      %c1_i32_10 = arith.constant 1 : i32
      %7 = arith.muli %arg9, %c1_i32_10 : i32
      %c0_i32_11 = arith.constant 0 : i32
      %8 = arith.addi %c0_i32_11, %7 : i32
      %9 = arith.addi %0, %8 : i32
      %10 = arith.index_cast %9 : i32 to index
      %11 = memref.load %arg1[%10] : memref<16xi32, #tpu.memory_space<smem>>
      %12 = arith.addi %0, %8 : i32
      %13 = arith.index_cast %12 : i32 to index
      %14 = memref.load %arg2[%13] : memref<16xi32, #tpu.memory_space<smem>>
      %c0_i32_12 = arith.constant 0 : i32
      %c0_i32_13 = arith.constant 0 : i32
      %15 = tpu.memref_slice %arg3[%11, %c0_i32_13] : memref<32x128xf32, #tpu.memory_space<any>> -> memref<1x128xf32, #tpu.memory_space<any>>
      %16 = tpu.memref_squeeze %15 : memref<1x128xf32, #tpu.memory_space<any>> -> memref<128xf32, #tpu.memory_space<any>>
      %c0_i32_14 = arith.constant 0 : i32
      %17 = tpu.memref_slice %arg6[%8, %c0_i32_14] : memref<16x128xf32, #tpu.memory_space<vmem>> -> memref<1x128xf32, #tpu.memory_space<vmem>>
      %18 = tpu.memref_squeeze %17 : memref<1x128xf32, #tpu.memory_space<vmem>> -> memref<128xf32, #tpu.memory_space<vmem>>
      %19 = tpu.memref_slice %arg8[%c0_i32_12] : memref<2x!tpu.dma_semaphore, #tpu.memory_space<semaphore_mem>> -> memref<1x!tpu.dma_semaphore, #tpu.memory_space<semaphore_mem>>
      %20 = tpu.memref_squeeze %19 : memref<1x!tpu.dma_semaphore, #tpu.memory_space<semaphore_mem>> -> memref<!tpu.dma_semaphore, #tpu.memory_space<semaphore_mem>>
      tpu.enqueue_dma source(%16 : memref<128xf32, #tpu.memory_space<any>>) target(%18 : memref<128xf32, #tpu.memory_space<vmem>>) target_semaphore(%20 : memref<!tpu.dma_semaphore, #tpu.memory_space<semaphore_mem>>)
      %c1_i32_15 = arith.constant 1 : i32
      %c0_i32_16 = arith.constant 0 : i32
      %21 = tpu.memref_slice %arg4[%14, %c0_i32_16] : memref<16x128xf32, #tpu.memory_space<any>> -> memref<1x128xf32, #tpu.memory_space<any>>
      %22 = tpu.memref_squeeze %21 : memref<1x128xf32, #tpu.memory_space<any>> -> memref<128xf32, #tpu.memory_space<any>>
      %c0_i32_17 = arith.constant 0 : i32
      %23 = tpu.memref_slice %arg7[%8, %c0_i32_17] : memref<16x128xf32, #tpu.memory_space<vmem>> -> memref<1x128xf32, #tpu.memory_space<vmem>>
      %24 = tpu.memref_squeeze %23 : memref<1x128xf32, #tpu.memory_space<vmem>> -> memref<128xf32, #tpu.memory_space<vmem>>
      %25 = tpu.memref_slice %arg8[%c1_i32_15] : memref<2x!tpu.dma_semaphore, #tpu.memory_space<semaphore_mem>> -> memref<1x!tpu.dma_semaphore, #tpu.memory_space<semaphore_mem>>
      %26 = tpu.memref_squeeze %25 : memref<1x!tpu.dma_semaphore, #tpu.memory_space<semaphore_mem>> -> memref<!tpu.dma_semaphore, #tpu.memory_space<semaphore_mem>>
      tpu.enqueue_dma source(%22 : memref<128xf32, #tpu.memory_space<any>>) target(%24 : memref<128xf32, #tpu.memory_space<vmem>>) target_semaphore(%26 : memref<!tpu.dma_semaphore, #tpu.memory_space<semaphore_mem>>)
    }
    %c16_i32_1 = arith.constant 16 : i32
    %c0_i32_2 = arith.constant 0 : i32
    %c16_i32_3 = arith.constant 16 : i32
    %2 = arith.addi %c0_i32_2, %c16_i32_3 : i32
    %c1_i32_4 = arith.constant 1 : i32
    scf.for %arg9 = %c0_i32_2 to %2 step %c1_i32_4  : i32 {
      %c0_i32_10 = arith.constant 0 : i32
      %c0_i32_11 = arith.constant 0 : i32
      %c0_i32_12 = arith.constant 0 : i32
      %c0_i32_13 = arith.constant 0 : i32
      %7 = tpu.memref_slice %arg3[%c0_i32_10, %c0_i32_13] : memref<32x128xf32, #tpu.memory_space<any>> -> memref<1x128xf32, #tpu.memory_space<any>>
      %8 = tpu.memref_squeeze %7 : memref<1x128xf32, #tpu.memory_space<any>> -> memref<128xf32, #tpu.memory_space<any>>
      %c0_i32_14 = arith.constant 0 : i32
      %9 = tpu.memref_slice %arg6[%c0_i32_11, %c0_i32_14] : memref<16x128xf32, #tpu.memory_space<vmem>> -> memref<1x128xf32, #tpu.memory_space<vmem>>
      %10 = tpu.memref_squeeze %9 : memref<1x128xf32, #tpu.memory_space<vmem>> -> memref<128xf32, #tpu.memory_space<vmem>>
      %11 = tpu.memref_slice %arg8[%c0_i32_12] : memref<2x!tpu.dma_semaphore, #tpu.memory_space<semaphore_mem>> -> memref<1x!tpu.dma_semaphore, #tpu.memory_space<semaphore_mem>>
      %12 = tpu.memref_squeeze %11 : memref<1x!tpu.dma_semaphore, #tpu.memory_space<semaphore_mem>> -> memref<!tpu.dma_semaphore, #tpu.memory_space<semaphore_mem>>
      tpu.wait_dma2 semaphore(%12 : memref<!tpu.dma_semaphore, #tpu.memory_space<semaphore_mem>>) src(%8 : memref<128xf32, #tpu.memory_space<any>>) dst(%10 : memref<128xf32, #tpu.memory_space<vmem>>)
      %c0_i32_15 = arith.constant 0 : i32
      %c0_i32_16 = arith.constant 0 : i32
      %c1_i32_17 = arith.constant 1 : i32
      %c0_i32_18 = arith.constant 0 : i32
      %13 = tpu.memref_slice %arg4[%c0_i32_15, %c0_i32_18] : memref<16x128xf32, #tpu.memory_space<any>> -> memref<1x128xf32, #tpu.memory_space<any>>
      %14 = tpu.memref_squeeze %13 : memref<1x128xf32, #tpu.memory_space<any>> -> memref<128xf32, #tpu.memory_space<any>>
      %c0_i32_19 = arith.constant 0 : i32
      %15 = tpu.memref_slice %arg7[%c0_i32_16, %c0_i32_19] : memref<16x128xf32, #tpu.memory_space<vmem>> -> memref<1x128xf32, #tpu.memory_space<vmem>>
      %16 = tpu.memref_squeeze %15 : memref<1x128xf32, #tpu.memory_space<vmem>> -> memref<128xf32, #tpu.memory_space<vmem>>
      %17 = tpu.memref_slice %arg8[%c1_i32_17] : memref<2x!tpu.dma_semaphore, #tpu.memory_space<semaphore_mem>> -> memref<1x!tpu.dma_semaphore, #tpu.memory_space<semaphore_mem>>
      %18 = tpu.memref_squeeze %17 : memref<1x!tpu.dma_semaphore, #tpu.memory_space<semaphore_mem>> -> memref<!tpu.dma_semaphore, #tpu.memory_space<semaphore_mem>>
      tpu.wait_dma2 semaphore(%18 : memref<!tpu.dma_semaphore, #tpu.memory_space<semaphore_mem>>) src(%14 : memref<128xf32, #tpu.memory_space<any>>) dst(%16 : memref<128xf32, #tpu.memory_space<vmem>>)
    }
    %c0 = arith.constant 0 : index
    %c0_5 = arith.constant 0 : index
    %3 = vector.load %arg6[%c0, %c0_5] : memref<16x128xf32, #tpu.memory_space<vmem>>, vector<16x128xf32>
    %c0_6 = arith.constant 0 : index
    %c0_7 = arith.constant 0 : index
    %4 = vector.load %arg7[%c0_6, %c0_7] : memref<16x128xf32, #tpu.memory_space<vmem>>, vector<16x128xf32>
    %5 = arith.addf %3, %4 : vector<16x128xf32>
    %c0_8 = arith.constant 0 : index
    %c0_9 = arith.constant 0 : index
    %6 = vector.load %arg5[%c0_8, %c0_9] : memref<16x128xf32, #tpu.memory_space<vmem>>, vector<16x128xf32>
    tpu.vector_store %arg5[%c0_8, %c0_9], %5 {strides = array<i32>} : memref<16x128xf32, #tpu.memory_space<vmem>>, vector<16x128xf32>,
    return
  }
  func.func @transform_2(%arg0: i32, %arg1: memref<16xi32, #tpu.memory_space<smem>>, %arg2: memref<16xi32, #tpu.memory_space<smem>>) -> (i32, i32) {
    %c0_i32 = arith.constant 0 : i32
    %c0_i32_0 = arith.constant 0 : i32
    return %arg0, %c0_i32 : i32, i32
  }
}

</mosaic_0001>

<llo_original>
// kernel: tpu_custom_call.1
$region0: #{tpu_custom_call.1}
  #allocation0 [shape = 'u32[]', space=smem, size = 0x4, offset = 0x4, fixed_abs, tag = 'smem constant byte address 0x4 - core index']
  #allocation1 [shape = 'u32[144,128]{1,0:T(1,128)}', space=vmem, size = 0x12000, scoped, tag = 'internal scratch']
  #allocation2 [shape = 'f32[16,128]{1,0:T(8,128)}', space=vmem, size = 0x2000, scoped, tag = 'scratch operand']
  #allocation3 [shape = 'f32[16,128]{1,0:T(8,128)}', space=vmem, size = 0x2000, scoped, tag = 'scratch operand']
  #allocation4 [shape = 's32[2]{0}', space=sflag, size = 0x8, scoped, tag = 'scratch operand']
  #allocation5 [shape = 's32[1]{0}', space=sflag, size = 0x4, scoped, tag = 'scoped memory for tpu_custom_call.1']
  #allocation6 [shape = 'u8[512]{0}', space=smem, size = 0x200, scoped, tag = 'prefetched SMEM operand 0']
  #allocation7 [shape = 'u8[512]{0}', space=smem, size = 0x200, scoped, tag = 'prefetched SMEM operand 1']
  #allocation10 [shape = 's32[]', space=sflag, size = 0x4, offset = 0, fixed_abs, tag = 'sflag constant byte address 0x0 - dummy sync flag']
  #allocation11 [shape = 's32[]', space=sflag, size = 0x4, offset = 0, fixed_abs, tag = 'sflag constant byte address 0x0 - dummy sync flag']
  #allocation12 [shape = 'u32[]', space=smem, size = 0x4, offset = 0x44, fixed_abs, tag = 'smem constant byte address 0x44 - assertion arg 0']
  #allocation13 [shape = 'u32[]', space=smem, size = 0x4, offset = 0x48, fixed_abs, tag = 'smem constant byte address 0x48 - assertion arg 1']
  #allocation14 [shape = 's32[]', space=sflag, size = 0x4, offset = 0, fixed_abs, tag = 'sflag constant byte address 0x0 - dummy sync flag']
  #allocation15 [shape = 's32[]', space=sflag, size = 0x4, offset = 0, fixed_abs, tag = 'sflag constant byte address 0x0 - dummy sync flag']
  %s0 = inlined_call_operand.hbm [shape: s32[16], index: 0, kind: input, shape index: {}]
  %s1 = inlined_call_operand.vmem [shape: s32[16], index: 1, kind: input, shape index: {}]
  %s2 = inlined_call_operand.hbm [shape: f32[32,128], index: 2, kind: input, shape index: {}]
  %s3 = inlined_call_operand.hbm [shape: f32[16,128], index: 3, kind: input, shape index: {}]
  %s4 = inlined_call_operand.hbm [shape: f32[16,128], index: 4, kind: output, shape index: {}]
  %s5 = sld [smem:[#allocation0]]
  $region32: #{tpu_custom_call.1} parent=0
    _
  %s7 = ssub.s32 1, %s5
  %s8 = scalar_select 0, %s7, %s5
  %10 = dma.hbm_to_smem %s0, 16, [#allocation6], [#allocation5]
  %s11 = sshll.u32 %s1, 4
  %s12 = int_to_ptr.vmem [resolvable:$true] %s11
  %14 = dma.vmem_to_smem %s12, 16, [#allocation7], [#allocation5]
  %15 = dma.done [#allocation5], 32
  %16 = sfence
  $region1: #{tpu_custom_call.1} parent=0
    #allocation8 [shape = 'u8[8192]{0}', space=vmem, size = 0x2000, scoped, tag = 'output window, operand 0, single buffered']
    #allocation9 [shape = 's32[1]{0}', space=sflag, size = 0x4, scoped, tag = 'scoped memory for tpu_custom_call.1']
    %17 = vsyncpa [#allocation9], 0
    %s18 = smul.u32 0, 16
    loop: start=0, step=1, limit=16
    $region2: #{tpu_custom_call.1} parent=1 // loop_pre_header
      _
    $region3: #{tpu_custom_call.1} parent=1 // loop_header
      %s20 = sphi 0, %s24
      %p21 = scmp.ge.s32.totalorder %s20, 16
    $region4: #{tpu_custom_call.1} parent=1 // loop_header_branch
      %23 = sbr.rel (%p21) target = $region8
    $region5: #{tpu_custom_call.1} parent=1 // loop_body
      %s25 = sadd.s32 %s18, %s20
      %s26 = sld [smem:[#allocation6 + %s25]]
      %s27 = sld [smem:[#allocation7 + %s25]]
      %s28 = smul.addr %s26, 16
      %s29 = scalar_lea.hbm %s2, %s28
      %s30 = scalar_lea.vmem [#allocation2], %s20
      // Predicated region
      $region9: #{tpu_custom_call.1} parent=5 // pred_check
        _
      $region10: #{tpu_custom_call.1} parent=5 // pred_check_branch
        %32 = sbr.rel target = $region12
      $region11: #{tpu_custom_call.1} parent=5 // pred_region
        %33 = sst [smem:[#allocation12]] [#allocation11]
        %34 = sst [smem:[#allocation13]] [#allocation10]
      $region12: #{tpu_custom_call.1} parent=5 // pred_fallthru
        _
      %36 = shalt.err (0)
      %s38 = sshll.u32 %s30, 4
      %s39 = int_to_ptr.vmem [resolvable:$true] %s38
      %41 = dma.hbm_to_vmem [thread:$0]  %s29, 16, %s39, [#allocation4]
      %s42 = smul.addr %s27, 16
      %s43 = scalar_lea.hbm %s3, %s42
      %s44 = scalar_lea.vmem [#allocation3], %s20
      %s45 = scalar_lea.sflag [#allocation4], 1
      // Predicated region
      $region13: #{tpu_custom_call.1} parent=5 // pred_check
        _
      $region14: #{tpu_custom_call.1} parent=5 // pred_check_branch
        %47 = sbr.rel target = $region16
      $region15: #{tpu_custom_call.1} parent=5 // pred_region
        %48 = sst [smem:[#allocation12]] [#allocation15]
        %49 = sst [smem:[#allocation13]] [#allocation14]
      $region16: #{tpu_custom_call.1} parent=5 // pred_fallthru
        _
      %51 = shalt.err (0)
      %s53 = sshll.u32 %s44, 4
      %s54 = int_to_ptr.vmem [resolvable:$true] %s53
      %56 = dma.hbm_to_vmem [thread:$0]  %s43, 16, %s54, %s45
    $region6: #{tpu_custom_call.1} parent=1 // loop_footer
      %s24 = sadd.s32 1, %s20
    $region7: #{tpu_custom_call.1} parent=1 // loop_footer_branch
      %19 = sbr.rel target = $region3
    $region8: #{tpu_custom_call.1} parent=1 // loop_exit
      _
    loop: start=0, step=1, limit=16
    $region17: #{tpu_custom_call.1} parent=1 // loop_pre_header
      _
    $region18: #{tpu_custom_call.1} parent=1 // loop_header
      %s58 = sphi 0, %s62
      %p59 = scmp.ge.s32.totalorder %s58, 16
    $region19: #{tpu_custom_call.1} parent=1 // loop_header_branch
      %61 = sbr.rel (%p59) target = $region23
    $region20: #{tpu_custom_call.1} parent=1 // loop_body
      %64 = dma.done [#allocation4], 16
      %s65 = scalar_lea.sflag [#allocation4], 1
      %67 = dma.done %s65, 16
    $region21: #{tpu_custom_call.1} parent=1 // loop_footer
      %s62 = sadd.s32 1, %s58
    $region22: #{tpu_custom_call.1} parent=1 // loop_footer_branch
      %57 = sbr.rel target = $region18
    $region23: #{tpu_custom_call.1} parent=1 // loop_exit
      _
    %v68 = vld [vmem:[#allocation2] sm:$0xff]
    %v69 = vld [vmem:[#allocation2 + $0x8] sm:$0xff]
    %v70 = vld [vmem:[#allocation3] sm:$0xff]
    %v71 = vld [vmem:[#allocation3 + $0x8] sm:$0xff]
    %v72 = vadd.f32 %v68, %v70
    %v73 = vadd.f32 %v69, %v71
    %74 = vst [vmem:[#allocation8] sm:$0xff] %v72
    %75 = vst [vmem:[#allocation8 + $0x8] sm:$0xff] %v73
    // Predicated region
    $region24: #{tpu_custom_call.1} parent=1 // pred_check
      _
    $region25: #{tpu_custom_call.1} parent=1 // pred_check_branch
      %77 = sbr.rel (0) target = $region27
    $region26: #{tpu_custom_call.1} parent=1 // pred_region
      %s79 = ssub.s32 256, 256
      %80 = vsyncadd [#allocation9], %s79
      %s81 = sshll.u32 [#allocation8], 4
      %s82 = int_to_ptr.vmem [resolvable:$true] %s81
      %87 = dma.vmem_to_hbm [thread:$0]  %s82, 256, %s4, [#allocation9], 128, 128, 8
    $region27: #{tpu_custom_call.1} parent=1 // pred_fallthru
      _
    // Predicated region
    $region28: #{tpu_custom_call.1} parent=1 // pred_check
      _
    $region29: #{tpu_custom_call.1} parent=1 // pred_check_branch
      %89 = sbr.rel (0) target = $region31
    $region30: #{tpu_custom_call.1} parent=1 // pred_region
      %90 = dma.done [#allocation9], 256
    $region31: #{tpu_custom_call.1} parent=1 // pred_fallthru
      _
    %91 = vsyncpa [#allocation9], 1
  %92 = vsyncmov [#allocation4]
  %s93 = vpop.sfrf %92
  %p94 = scmp.eq.s32.totalorder %s93, 0
  %p95 = pneg %p94
  %97 = shalt.err (%p95)
  %s98 = scalar_lea.sflag [#allocation4], 1
  %99 = vsyncmov %s98
  %s100 = vpop.sfrf %99
  %p101 = scmp.eq.s32.totalorder %s100, 0
  %p102 = pneg %p101
  %104 = shalt.err (%p102)

</llo_original>
